<compile_context>
chip_gen: v7x
topology: tpu7x:2x2x1
jax: 0.10.0
libtpu: 0.0.40
codegen_flags: <defaults>
</compile_context>

<pallas_src>
import functools

import jax
import jax.numpy as jnp
from jax.experimental import pallas as pl
from jax.experimental.pallas import tpu as pltpu

N_LAYERS = 10
FEAT = 10


def module_list_kernel(x_ref, w_ref, b_ref, o_ref):
    # x_ref: (TB, FEAT)
    # w_ref: (N_LAYERS, FEAT, FEAT), pre-transposed so y = x @ w_ref[i] + b_ref[i]
    # b_ref: (N_LAYERS, 1, FEAT)
    x = x_ref[...].astype(jnp.float32)
    for i in range(N_LAYERS):  # static unroll: 10 dependent (TB,10)x(10,10) MXU ops
        x = jnp.dot(x, w_ref[i], preferred_element_type=jnp.float32) + b_ref[i]
    o_ref[...] = x.astype(o_ref.dtype)


@functools.partial(jax.jit, static_argnames=("tb",))
def my_module_list_forward(x, w_stack, b_stack, *, tb=512):
    B, F = x.shape
    assert F == FEAT

    # ---- one-time algebraic hoisting (outside the kernel) -------------------
    pair = jnp.arange(N_LAYERS) // 2
    w_eff = jnp.transpose(w_stack[pair] + w_stack, (0, 2, 1))  # (L, F, F): x @ w_eff[i]
    b_eff = (b_stack[pair] + b_stack)[:, None, :]              # (L, 1, F)

    # ---- batch tiling: TB rows per grid step (multiple of 8 sublanes) -------
    TB = max(8, min(tb, ((B + 7) // 8) * 8))
    TB = ((TB + 7) // 8) * 8
    Bp = pl.cdiv(B, TB) * TB
    xp = x if Bp == B else jnp.pad(x, ((0, Bp - B), (0, 0)))

    out = pl.pallas_call(
        module_list_kernel,
        out_shape=jax.ShapeDtypeStruct((Bp, FEAT), x.dtype),
        grid=(Bp // TB,),
        in_specs=[
            pl.BlockSpec((TB, FEAT), lambda i: (i, 0)),
            pl.BlockSpec((N_LAYERS, FEAT, FEAT), lambda i: (0, 0, 0)),  # grid-invariant
            pl.BlockSpec((N_LAYERS, 1, FEAT), lambda i: (0, 0, 0)),     # grid-invariant
        ],
        out_specs=pl.BlockSpec((TB, FEAT), lambda i: (i, 0)),
        compiler_params=pltpu.CompilerParams(
            dimension_semantics=("parallel",),
        ),
        cost_estimate=pl.CostEstimate(
            flops=2 * Bp * FEAT * FEAT * N_LAYERS,
            transcendentals=0,
            bytes_accessed=(2 * Bp * FEAT
                            + N_LAYERS * FEAT * FEAT
                            + N_LAYERS * FEAT) * 4,
        ),
    )(xp, w_eff, b_eff)
    return out[:B]


def init_params(key):
    # Deterministic init mimicking torch.nn.Linear default (uniform +/- 1/sqrt(fan_in)).
    bound = 1.0 / jnp.sqrt(float(FEAT))
    kw, kb = jax.random.split(key)
    w = jax.random.uniform(kw, (N_LAYERS, FEAT, FEAT), jnp.float32, -bound, bound)
    b = jax.random.uniform(kb, (N_LAYERS, FEAT), jnp.float32, -bound, bound)
    return w, b


def reference_forward(x, w, b):
    # Pure-JAX reference of the PyTorch forward (unfused pairs, PyTorch convention).
    for i in range(N_LAYERS):
        a = i // 2
        x = (x @ w[a].T + b[a]) + (x @ w[i].T + b[i])
    return x


if __name__ == "__main__":
    key = jax.random.PRNGKey(0)
    kx, kp = jax.random.split(key)
    B = 8
    x = jax.random.normal(kx, (B, FEAT), jnp.float32)
    w_stack, b_stack = init_params(kp)

    out = my_module_list_forward(x, w_stack, b_stack)
    out = jax.block_until_ready(out)

    ref = reference_forward(x, w_stack, b_stack)
    assert out.shape == (B, FEAT)
    # Pair-combined weights reassociate fp32 sums -> bitwise differs in last ulps only.
    assert jnp.allclose(out, ref, rtol=1e-4, atol=1e-4), "mismatch vs reference"

    print("KERNEL_OK")
</pallas_src>

<mosaic_0001>
module attributes {stable_mosaic.version = 11 : i64} {
  func.func @module_list_kernel(%arg0: i32, %arg1: memref<8x10xf32, #tpu.memory_space<vmem>>, %arg2: memref<10x10x10xf32, #tpu.memory_space<vmem>>, %arg3: memref<10x1x10xf32, #tpu.memory_space<vmem>>, %arg4: memref<8x10xf32, #tpu.memory_space<vmem>>) attributes {dimension_semantics = [#tpu.dimension_semantics<parallel>], iteration_bounds = array<i64: 1>, scalar_prefetch = 0 : i64, scratch_operands = 0 : i64, tpu.core_type = #tpu.core_type<tc>, window_params = [{transform_indices = @transform_0, window_bounds = array<i64: 8, 10>}, {pipeline_mode = #tpu.pipeline_mode<synchronous>, transform_indices = @transform_1, window_bounds = array<i64: 10, 10, 10>}, {pipeline_mode = #tpu.pipeline_mode<synchronous>, transform_indices = @transform_2, window_bounds = array<i64: 10, 1, 10>}, {transform_indices = @transform_3, window_bounds = array<i64: 8, 10>}]} {
    %c0 = arith.constant 0 : index
    %c0_0 = arith.constant 0 : index
    %0 = vector.load %arg1[%c0, %c0_0] : memref<8x10xf32, #tpu.memory_space<vmem>>, vector<8x10xf32>
    %c0_1 = arith.constant 0 : index
    %c0_2 = arith.constant 0 : index
    %c0_3 = arith.constant 0 : index
    %1 = vector.load %arg2[%c0_1, %c0_2, %c0_3] : memref<10x10x10xf32, #tpu.memory_space<vmem>>, vector<1x10x10xf32>
    %2 = vector.shape_cast %1 : vector<1x10x10xf32> to vector<10x10xf32>
    %cst = arith.constant dense<0.000000e+00> : vector<8x10xf32>
    %3 = tpu.matmul %0, %2, %cst {dimension_numbers = #tpu.dot_dimension_numbers<[1], [0], [0], [1], [0, 0, 1, 1], [], []>} : vector<8x10xf32>, vector<10x10xf32>, vector<8x10xf32> -> vector<8x10xf32>
    %c0_4 = arith.constant 0 : index
    %c0_5 = arith.constant 0 : index
    %c0_6 = arith.constant 0 : index
    %4 = vector.load %arg3[%c0_4, %c0_5, %c0_6] : memref<10x1x10xf32, #tpu.memory_space<vmem>>, vector<1x1x10xf32>
    %5 = vector.shape_cast %4 : vector<1x1x10xf32> to vector<1x10xf32>
    %6 = vector.broadcast %5 : vector<1x10xf32> to vector<8x10xf32>
    %7 = arith.addf %3, %6 : vector<8x10xf32>
    %c1 = arith.constant 1 : index
    %c0_7 = arith.constant 0 : index
    %c0_8 = arith.constant 0 : index
    %8 = vector.load %arg2[%c1, %c0_7, %c0_8] : memref<10x10x10xf32, #tpu.memory_space<vmem>>, vector<1x10x10xf32>
    %9 = vector.shape_cast %8 : vector<1x10x10xf32> to vector<10x10xf32>
    %cst_9 = arith.constant dense<0.000000e+00> : vector<8x10xf32>
    %10 = tpu.matmul %7, %9, %cst_9 {dimension_numbers = #tpu.dot_dimension_numbers<[1], [0], [0], [1], [0, 0, 1, 1], [], []>} : vector<8x10xf32>, vector<10x10xf32>, vector<8x10xf32> -> vector<8x10xf32>
    %c1_10 = arith.constant 1 : index
    %c0_11 = arith.constant 0 : index
    %c0_12 = arith.constant 0 : index
    %11 = vector.load %arg3[%c1_10, %c0_11, %c0_12] : memref<10x1x10xf32, #tpu.memory_space<vmem>>, vector<1x1x10xf32>
    %12 = vector.shape_cast %11 : vector<1x1x10xf32> to vector<1x10xf32>
    %13 = vector.broadcast %12 : vector<1x10xf32> to vector<8x10xf32>
    %14 = arith.addf %10, %13 : vector<8x10xf32>
    %c2 = arith.constant 2 : index
    %c0_13 = arith.constant 0 : index
    %c0_14 = arith.constant 0 : index
    %15 = vector.load %arg2[%c2, %c0_13, %c0_14] : memref<10x10x10xf32, #tpu.memory_space<vmem>>, vector<1x10x10xf32>
    %16 = vector.shape_cast %15 : vector<1x10x10xf32> to vector<10x10xf32>
    %cst_15 = arith.constant dense<0.000000e+00> : vector<8x10xf32>
    %17 = tpu.matmul %14, %16, %cst_15 {dimension_numbers = #tpu.dot_dimension_numbers<[1], [0], [0], [1], [0, 0, 1, 1], [], []>} : vector<8x10xf32>, vector<10x10xf32>, vector<8x10xf32> -> vector<8x10xf32>
    %c2_16 = arith.constant 2 : index
    %c0_17 = arith.constant 0 : index
    %c0_18 = arith.constant 0 : index
    %18 = vector.load %arg3[%c2_16, %c0_17, %c0_18] : memref<10x1x10xf32, #tpu.memory_space<vmem>>, vector<1x1x10xf32>
    %19 = vector.shape_cast %18 : vector<1x1x10xf32> to vector<1x10xf32>
    %20 = vector.broadcast %19 : vector<1x10xf32> to vector<8x10xf32>
    %21 = arith.addf %17, %20 : vector<8x10xf32>
    %c3 = arith.constant 3 : index
    %c0_19 = arith.constant 0 : index
    %c0_20 = arith.constant 0 : index
    %22 = vector.load %arg2[%c3, %c0_19, %c0_20] : memref<10x10x10xf32, #tpu.memory_space<vmem>>, vector<1x10x10xf32>
    %23 = vector.shape_cast %22 : vector<1x10x10xf32> to vector<10x10xf32>
    %cst_21 = arith.constant dense<0.000000e+00> : vector<8x10xf32>
    %24 = tpu.matmul %21, %23, %cst_21 {dimension_numbers = #tpu.dot_dimension_numbers<[1], [0], [0], [1], [0, 0, 1, 1], [], []>} : vector<8x10xf32>, vector<10x10xf32>, vector<8x10xf32> -> vector<8x10xf32>
    %c3_22 = arith.constant 3 : index
    %c0_23 = arith.constant 0 : index
    %c0_24 = arith.constant 0 : index
    %25 = vector.load %arg3[%c3_22, %c0_23, %c0_24] : memref<10x1x10xf32, #tpu.memory_space<vmem>>, vector<1x1x10xf32>
    %26 = vector.shape_cast %25 : vector<1x1x10xf32> to vector<1x10xf32>
    %27 = vector.broadcast %26 : vector<1x10xf32> to vector<8x10xf32>
    %28 = arith.addf %24, %27 : vector<8x10xf32>
    %c4 = arith.constant 4 : index
    %c0_25 = arith.constant 0 : index
    %c0_26 = arith.constant 0 : index
    %29 = vector.load %arg2[%c4, %c0_25, %c0_26] : memref<10x10x10xf32, #tpu.memory_space<vmem>>, vector<1x10x10xf32>
    %30 = vector.shape_cast %29 : vector<1x10x10xf32> to vector<10x10xf32>
    %cst_27 = arith.constant dense<0.000000e+00> : vector<8x10xf32>
    %31 = tpu.matmul %28, %30, %cst_27 {dimension_numbers = #tpu.dot_dimension_numbers<[1], [0], [0], [1], [0, 0, 1, 1], [], []>} : vector<8x10xf32>, vector<10x10xf32>, vector<8x10xf32> -> vector<8x10xf32>
    %c4_28 = arith.constant 4 : index
    %c0_29 = arith.constant 0 : index
    %c0_30 = arith.constant 0 : index
    %32 = vector.load %arg3[%c4_28, %c0_29, %c0_30] : memref<10x1x10xf32, #tpu.memory_space<vmem>>, vector<1x1x10xf32>
    %33 = vector.shape_cast %32 : vector<1x1x10xf32> to vector<1x10xf32>
    %34 = vector.broadcast %33 : vector<1x10xf32> to vector<8x10xf32>
    %35 = arith.addf %31, %34 : vector<8x10xf32>
    %c5 = arith.constant 5 : index
    %c0_31 = arith.constant 0 : index
    %c0_32 = arith.constant 0 : index
    %36 = vector.load %arg2[%c5, %c0_31, %c0_32] : memref<10x10x10xf32, #tpu.memory_space<vmem>>, vector<1x10x10xf32>
    %37 = vector.shape_cast %36 : vector<1x10x10xf32> to vector<10x10xf32>
    %cst_33 = arith.constant dense<0.000000e+00> : vector<8x10xf32>
    %38 = tpu.matmul %35, %37, %cst_33 {dimension_numbers = #tpu.dot_dimension_numbers<[1], [0], [0], [1], [0, 0, 1, 1], [], []>} : vector<8x10xf32>, vector<10x10xf32>, vector<8x10xf32> -> vector<8x10xf32>
    %c5_34 = arith.constant 5 : index
    %c0_35 = arith.constant 0 : index
    %c0_36 = arith.constant 0 : index
    %39 = vector.load %arg3[%c5_34, %c0_35, %c0_36] : memref<10x1x10xf32, #tpu.memory_space<vmem>>, vector<1x1x10xf32>
    %40 = vector.shape_cast %39 : vector<1x1x10xf32> to vector<1x10xf32>
    %41 = vector.broadcast %40 : vector<1x10xf32> to vector<8x10xf32>
    %42 = arith.addf %38, %41 : vector<8x10xf32>
    %c6 = arith.constant 6 : index
    %c0_37 = arith.constant 0 : index
    %c0_38 = arith.constant 0 : index
    %43 = vector.load %arg2[%c6, %c0_37, %c0_38] : memref<10x10x10xf32, #tpu.memory_space<vmem>>, vector<1x10x10xf32>
    %44 = vector.shape_cast %43 : vector<1x10x10xf32> to vector<10x10xf32>
    %cst_39 = arith.constant dense<0.000000e+00> : vector<8x10xf32>
    %45 = tpu.matmul %42, %44, %cst_39 {dimension_numbers = #tpu.dot_dimension_numbers<[1], [0], [0], [1], [0, 0, 1, 1], [], []>} : vector<8x10xf32>, vector<10x10xf32>, vector<8x10xf32> -> vector<8x10xf32>
    %c6_40 = arith.constant 6 : index
    %c0_41 = arith.constant 0 : index
    %c0_42 = arith.constant 0 : index
    %46 = vector.load %arg3[%c6_40, %c0_41, %c0_42] : memref<10x1x10xf32, #tpu.memory_space<vmem>>, vector<1x1x10xf32>
    %47 = vector.shape_cast %46 : vector<1x1x10xf32> to vector<1x10xf32>
    %48 = vector.broadcast %47 : vector<1x10xf32> to vector<8x10xf32>
    %49 = arith.addf %45, %48 : vector<8x10xf32>
    %c7 = arith.constant 7 : index
    %c0_43 = arith.constant 0 : index
    %c0_44 = arith.constant 0 : index
    %50 = vector.load %arg2[%c7, %c0_43, %c0_44] : memref<10x10x10xf32, #tpu.memory_space<vmem>>, vector<1x10x10xf32>
    %51 = vector.shape_cast %50 : vector<1x10x10xf32> to vector<10x10xf32>
    %cst_45 = arith.constant dense<0.000000e+00> : vector<8x10xf32>
    %52 = tpu.matmul %49, %51, %cst_45 {dimension_numbers = #tpu.dot_dimension_numbers<[1], [0], [0], [1], [0, 0, 1, 1], [], []>} : vector<8x10xf32>, vector<10x10xf32>, vector<8x10xf32> -> vector<8x10xf32>
    %c7_46 = arith.constant 7 : index
    %c0_47 = arith.constant 0 : index
    %c0_48 = arith.constant 0 : index
    %53 = vector.load %arg3[%c7_46, %c0_47, %c0_48] : memref<10x1x10xf32, #tpu.memory_space<vmem>>, vector<1x1x10xf32>
    %54 = vector.shape_cast %53 : vector<1x1x10xf32> to vector<1x10xf32>
    %55 = vector.broadcast %54 : vector<1x10xf32> to vector<8x10xf32>
    %56 = arith.addf %52, %55 : vector<8x10xf32>
    %c8 = arith.constant 8 : index
    %c0_49 = arith.constant 0 : index
    %c0_50 = arith.constant 0 : index
    %57 = vector.load %arg2[%c8, %c0_49, %c0_50] : memref<10x10x10xf32, #tpu.memory_space<vmem>>, vector<1x10x10xf32>
    %58 = vector.shape_cast %57 : vector<1x10x10xf32> to vector<10x10xf32>
    %cst_51 = arith.constant dense<0.000000e+00> : vector<8x10xf32>
    %59 = tpu.matmul %56, %58, %cst_51 {dimension_numbers = #tpu.dot_dimension_numbers<[1], [0], [0], [1], [0, 0, 1, 1], [], []>} : vector<8x10xf32>, vector<10x10xf32>, vector<8x10xf32> -> vector<8x10xf32>
    %c8_52 = arith.constant 8 : index
    %c0_53 = arith.constant 0 : index
    %c0_54 = arith.constant 0 : index
    %60 = vector.load %arg3[%c8_52, %c0_53, %c0_54] : memref<10x1x10xf32, #tpu.memory_space<vmem>>, vector<1x1x10xf32>
    %61 = vector.shape_cast %60 : vector<1x1x10xf32> to vector<1x10xf32>
    %62 = vector.broadcast %61 : vector<1x10xf32> to vector<8x10xf32>
    %63 = arith.addf %59, %62 : vector<8x10xf32>
    %c9 = arith.constant 9 : index
    %c0_55 = arith.constant 0 : index
    %c0_56 = arith.constant 0 : index
    %64 = vector.load %arg2[%c9, %c0_55, %c0_56] : memref<10x10x10xf32, #tpu.memory_space<vmem>>, vector<1x10x10xf32>
    %65 = vector.shape_cast %64 : vector<1x10x10xf32> to vector<10x10xf32>
    %cst_57 = arith.constant dense<0.000000e+00> : vector<8x10xf32>
    %66 = tpu.matmul %63, %65, %cst_57 {dimension_numbers = #tpu.dot_dimension_numbers<[1], [0], [0], [1], [0, 0, 1, 1], [], []>} : vector<8x10xf32>, vector<10x10xf32>, vector<8x10xf32> -> vector<8x10xf32>
    %c9_58 = arith.constant 9 : index
    %c0_59 = arith.constant 0 : index
    %c0_60 = arith.constant 0 : index
    %67 = vector.load %arg3[%c9_58, %c0_59, %c0_60] : memref<10x1x10xf32, #tpu.memory_space<vmem>>, vector<1x1x10xf32>
    %68 = vector.shape_cast %67 : vector<1x1x10xf32> to vector<1x10xf32>
    %69 = vector.broadcast %68 : vector<1x10xf32> to vector<8x10xf32>
    %70 = arith.addf %66, %69 : vector<8x10xf32>
    %c0_61 = arith.constant 0 : index
    %c0_62 = arith.constant 0 : index
    %71 = vector.load %arg4[%c0_61, %c0_62] : memref<8x10xf32, #tpu.memory_space<vmem>>, vector<8x10xf32>
    tpu.vector_store %arg4[%c0_61, %c0_62], %70 {strides = array<i32>} : memref<8x10xf32, #tpu.memory_space<vmem>>, vector<8x10xf32>,
    return
  }
  func.func @transform_0(%arg0: i32) -> (i32, i32) {
    %c0_i32 = arith.constant 0 : i32
    %c0_i32_0 = arith.constant 0 : i32
    return %arg0, %c0_i32 : i32, i32
  }
  func.func @transform_1(%arg0: i32) -> (i32, i32, i32) {
    %c0_i32 = arith.constant 0 : i32
    %c0_i32_0 = arith.constant 0 : i32
    %c0_i32_1 = arith.constant 0 : i32
    %c0_i32_2 = arith.constant 0 : i32
    return %c0_i32, %c0_i32_0, %c0_i32_1 : i32, i32, i32
  }
  func.func @transform_2(%arg0: i32) -> (i32, i32, i32) {
    %c0_i32 = arith.constant 0 : i32
    %c0_i32_0 = arith.constant 0 : i32
    %c0_i32_1 = arith.constant 0 : i32
    %c0_i32_2 = arith.constant 0 : i32
    return %c0_i32, %c0_i32_0, %c0_i32_1 : i32, i32, i32
  }
  func.func @transform_3(%arg0: i32) -> (i32, i32) {
    %c0_i32 = arith.constant 0 : i32
    %c0_i32_0 = arith.constant 0 : i32
    return %arg0, %c0_i32 : i32, i32
  }
}

</mosaic_0001>

<llo_original>
// kernel: my_module_list_forward.1
$region0: #{my_module_list_forward.1}
  #allocation0 [shape = 'u32[]', space=smem, size = 0x4, offset = 0x4, fixed_abs, tag = 'smem constant byte address 0x4 - core index']
  #allocation1 [shape = 'u32[144,128]{1,0:T(1,128)}', space=vmem, size = 0x12000, scoped, tag = 'internal scratch']
  %s0 = inlined_call_operand.vmem [shape: f32[8,10], index: 0, kind: input, shape index: {}]
  %s1 = inlined_call_operand.vmem [shape: f32[10,10,10], index: 1, kind: input, shape index: {}]
  %s2 = inlined_call_operand.vmem [shape: f32[10,1,10], index: 2, kind: input, shape index: {}]
  %s3 = inlined_call_operand.hbm [shape: f32[8,10], index: 3, kind: output, shape index: {}]
  %s4 = sld [smem:[#allocation0]]
  $region22: #{my_module_list_forward.1} parent=0
    _
  %s6 = ssub.s32 1, %s4
  %s7 = scalar_select 0, %s6, %s4
  $region1: #{my_module_list_forward.1} parent=0
    #allocation2 [shape = 'u8[4096]{0}', space=vmem, size = 0x1000, scoped, tag = 'output window, operand 0, single buffered']
    #allocation3 [shape = 's32[1]{0}', space=sflag, size = 0x4, scoped, tag = 'scoped memory for my_module_list_forward.1']
    %8 = vsyncpa [#allocation3], 0
    // Predicated region
    $region2: #{my_module_list_forward.1} parent=1 // pred_check
      _
    $region3: #{my_module_list_forward.1} parent=1 // pred_check_branch
      %10 = sbr.rel (0) target = $region5
    $region4: #{my_module_list_forward.1} parent=1 // pred_region
      _
    $region5: #{my_module_list_forward.1} parent=1 // pred_fallthru
      _
    // Predicated region
    $region6: #{my_module_list_forward.1} parent=1 // pred_check
      _
    $region7: #{my_module_list_forward.1} parent=1 // pred_check_branch
      %12 = sbr.rel (0) target = $region9
    $region8: #{my_module_list_forward.1} parent=1 // pred_region
      _
    $region9: #{my_module_list_forward.1} parent=1 // pred_fallthru
      _
    // Predicated region
    $region10: #{my_module_list_forward.1} parent=1 // pred_check
      _
    $region11: #{my_module_list_forward.1} parent=1 // pred_check_branch
      %14 = sbr.rel (0) target = $region13
    $region12: #{my_module_list_forward.1} parent=1 // pred_region
      _
    $region13: #{my_module_list_forward.1} parent=1 // pred_fallthru
      _
    %v15 = vld [vmem:[%s0] sm:$0xff]
    %v16 = vld [vmem:[%s1] sm:$0xff]
    %v17 = vld [vmem:[%s1 + $0x8] sm:$0x3]
    %v18 = vld [vmem:[%s2] sm:$0x1]
    %v20 = vlaneseq
    %v21 = vshrl.u32 %v20, 7
    %v22 = vsub.s32 0, %v21
    %v23 = vrot.slane %v18, %v22
    %vm25 = vcmask 80896
    %v27 = vsel %vm25, %v15, 0
    %vm29 = vcmask 1041408
    %v31 = vsel %vm29, %v17, 0
    %33 = vmatprep.subr.mxu0 0.0
    %34 = vmatpush1.msra.mxu0 %v16
    %35 = vmatprep.subr.mxu0 0.0
    %36 = vmatpush1.msra.mxu0 %v31
    %37 = vmatprep.subr.mxu0 0.0
    %38 = vmatpush1.msra.mxu0 0.0
    %39 = vmatprep.subr.mxu0 0.0
    %40 = vmatpush1.msra.mxu0 0.0
    %41 = vmatprep.subr.mxu0 0.0
    %42 = vmatpush1.msra.mxu0 0.0
    %43 = vmatprep.subr.mxu0 0.0
    %44 = vmatpush1.msra.mxu0 0.0
    %45 = vmatprep.subr.mxu0 0.0
    %46 = vmatpush1.msra.mxu0 0.0
    %47 = vmatprep.subr.mxu0 0.0
    %48 = vmatpush1.msra.mxu0 0.0
    %49 = vmatprep.subr.mxu0 0.0
    %50 = vmatpush1.msra.mxu0 0.0
    %51 = vmatprep.subr.mxu0 0.0
    %52 = vmatpush1.msra.mxu0 0.0
    %53 = vmatprep.subr.mxu0 0.0
    %54 = vmatpush1.msra.mxu0 0.0
    %55 = vmatprep.subr.mxu0 0.0
    %56 = vmatpush1.msra.mxu0 0.0
    %57 = vmatprep.subr.mxu0 0.0
    %58 = vmatpush1.msra.mxu0 0.0
    %59 = vmatprep.subr.mxu0 0.0
    %60 = vmatpush1.msra.mxu0 0.0
    %61 = vmatprep.subr.mxu0 0.0
    %62 = vmatpush1.msra.mxu0 0.0
    %63 = vmatprep.subr.mxu0 0.0
    %64 = vmatpush1.msra.mxu0 0.0
    %65 = vmatprep.subr.mxu0 0.0
    %66 = vmatpush1.msra.mxu0 0.0
    %67 = vmatprep.subr.mxu0 0.0
    %68 = vmatpush1.msra.mxu0 0.0
    %69 = vmatprep.subr.mxu0 0.0
    %70 = vmatpush1.msra.mxu0 0.0
    %71 = vmatprep.subr.mxu0 0.0
    %72 = vmatpush1.msra.mxu0 0.0
    %73 = vmatprep.subr.mxu0 0.0
    %74 = vmatpush1.msra.mxu0 0.0
    %75 = vmatprep.subr.mxu0 0.0
    %76 = vmatpush1.msra.mxu0 0.0
    %77 = vmatprep.subr.mxu0 0.0
    %78 = vmatpush1.msra.mxu0 0.0
    %79 = vmatprep.subr.mxu0 0.0
    %80 = vmatpush1.msra.mxu0 0.0
    %81 = vmatprep.subr.mxu0 0.0
    %82 = vmatpush1.msra.mxu0 0.0
    %83 = vmatprep.subr.mxu0 0.0
    %84 = vmatpush1.msra.mxu0 0.0
    %85 = vmatprep.subr.mxu0 0.0
    %86 = vmatpush1.msra.mxu0 0.0
    %87 = vmatprep.subr.mxu0 0.0
    %88 = vmatpush1.msra.mxu0 0.0
    %89 = vmatprep.subr.mxu0 0.0
    %90 = vmatpush1.msra.mxu0 0.0
    %91 = vmatprep.subr.mxu0 0.0
    %92 = vmatpush1.msra.mxu0 0.0
    %93 = vmatprep.subr.mxu0 0.0
    %94 = vmatpush1.msra.mxu0 0.0
    %95 = vmatprep.subr.mxu0 0.0
    %96 = vmatpush1.msra.mxu0 0.0
    %97 = vmatprep.mubr.f32.mxu0 0.0
    %98 = vmatmul.mubr.f32.gmra.mrb[0].mxu0 %v27
    %v99 = vpop.f32.mrb[0].mxu0
    %v100 = vadd.f32 %v23, %v99
    %v101 = vpop.f32.mrb[0].mxu0
    %102 = vdwg.mxu0
    %s103 = scalar_lea.vmem %s1, 16
    %v104 = vld [vmem:[%s103] sm:$0xff]
    %v105 = vld [vmem:[%s103 + $0x8] sm:$0x3]
    %s106 = scalar_lea.vmem %s2, 1
    %v107 = vld [vmem:[%s106] sm:$0x1]
    %v109 = vlaneseq
    %v110 = vshrl.u32 %v109, 7
    %v111 = vsub.s32 0, %v110
    %v112 = vrot.slane %v107, %v111
    %v115 = vsel %vm25, %v100, 0
    %v118 = vsel %vm29, %v105, 0
    %120 = vmatprep.subr.mxu0 0.0
    %121 = vmatpush1.msra.mxu0 %v104
    %122 = vmatprep.subr.mxu0 0.0
    %123 = vmatpush1.msra.mxu0 %v118
    %124 = vmatprep.subr.mxu0 0.0
    %125 = vmatpush1.msra.mxu0 0.0
    %126 = vmatprep.subr.mxu0 0.0
    %127 = vmatpush1.msra.mxu0 0.0
    %128 = vmatprep.subr.mxu0 0.0
    %129 = vmatpush1.msra.mxu0 0.0
    %130 = vmatprep.subr.mxu0 0.0
    %131 = vmatpush1.msra.mxu0 0.0
    %132 = vmatprep.subr.mxu0 0.0
    %133 = vmatpush1.msra.mxu0 0.0
    %134 = vmatprep.subr.mxu0 0.0
    %135 = vmatpush1.msra.mxu0 0.0
    %136 = vmatprep.subr.mxu0 0.0
    %137 = vmatpush1.msra.mxu0 0.0
    %138 = vmatprep.subr.mxu0 0.0
    %139 = vmatpush1.msra.mxu0 0.0
    %140 = vmatprep.subr.mxu0 0.0
    %141 = vmatpush1.msra.mxu0 0.0
    %142 = vmatprep.subr.mxu0 0.0
    %143 = vmatpush1.msra.mxu0 0.0
    %144 = vmatprep.subr.mxu0 0.0
    %145 = vmatpush1.msra.mxu0 0.0
    %146 = vmatprep.subr.mxu0 0.0
    %147 = vmatpush1.msra.mxu0 0.0
    %148 = vmatprep.subr.mxu0 0.0
    %149 = vmatpush1.msra.mxu0 0.0
    %150 = vmatprep.subr.mxu0 0.0
    %151 = vmatpush1.msra.mxu0 0.0
    %152 = vmatprep.subr.mxu0 0.0
    %153 = vmatpush1.msra.mxu0 0.0
    %154 = vmatprep.subr.mxu0 0.0
    %155 = vmatpush1.msra.mxu0 0.0
    %156 = vmatprep.subr.mxu0 0.0
    %157 = vmatpush1.msra.mxu0 0.0
    %158 = vmatprep.subr.mxu0 0.0
    %159 = vmatpush1.msra.mxu0 0.0
    %160 = vmatprep.subr.mxu0 0.0
    %161 = vmatpush1.msra.mxu0 0.0
    %162 = vmatprep.subr.mxu0 0.0
    %163 = vmatpush1.msra.mxu0 0.0
    %164 = vmatprep.subr.mxu0 0.0
    %165 = vmatpush1.msra.mxu0 0.0
    %166 = vmatprep.subr.mxu0 0.0
    %167 = vmatpush1.msra.mxu0 0.0
    %168 = vmatprep.subr.mxu0 0.0
    %169 = vmatpush1.msra.mxu0 0.0
    %170 = vmatprep.subr.mxu0 0.0
    %171 = vmatpush1.msra.mxu0 0.0
    %172 = vmatprep.subr.mxu0 0.0
    %173 = vmatpush1.msra.mxu0 0.0
    %174 = vmatprep.subr.mxu0 0.0
    %175 = vmatpush1.msra.mxu0 0.0
    %176 = vmatprep.subr.mxu0 0.0
    %177 = vmatpush1.msra.mxu0 0.0
    %178 = vmatprep.subr.mxu0 0.0
    %179 = vmatpush1.msra.mxu0 0.0
    %180 = vmatprep.subr.mxu0 0.0
    %181 = vmatpush1.msra.mxu0 0.0
    %182 = vmatprep.subr.mxu0 0.0
    %183 = vmatpush1.msra.mxu0 0.0
    %184 = vmatprep.mubr.f32.mxu0 0.0
    %185 = vmatmul.mubr.f32.gmra.mrb[0].mxu0 %v115
    %v186 = vpop.f32.mrb[0].mxu0
    %v187 = vadd.f32 %v112, %v186
    %v188 = vpop.f32.mrb[0].mxu0
    %189 = vdwg.mxu0
    %s190 = scalar_lea.vmem %s1, 32
    %v191 = vld [vmem:[%s190] sm:$0xff]
    %v192 = vld [vmem:[%s190 + $0x8] sm:$0x3]
    %s193 = scalar_lea.vmem %s2, 2
    %v194 = vld [vmem:[%s193] sm:$0x1]
    %v196 = vlaneseq
    %v197 = vshrl.u32 %v196, 7
    %v198 = vsub.s32 0, %v197
    %v199 = vrot.slane %v194, %v198
    %v202 = vsel %vm25, %v187, 0
    %v205 = vsel %vm29, %v192, 0
    %207 = vmatprep.subr.mxu0 0.0
    %208 = vmatpush1.msra.mxu0 %v191
    %209 = vmatprep.subr.mxu0 0.0
    %210 = vmatpush1.msra.mxu0 %v205
    %211 = vmatprep.subr.mxu0 0.0
    %212 = vmatpush1.msra.mxu0 0.0
    %213 = vmatprep.subr.mxu0 0.0
    %214 = vmatpush1.msra.mxu0 0.0
    %215 = vmatprep.subr.mxu0 0.0
    %216 = vmatpush1.msra.mxu0 0.0
    %217 = vmatprep.subr.mxu0 0.0
    %218 = vmatpush1.msra.mxu0 0.0
    %219 = vmatprep.subr.mxu0 0.0
    %220 = vmatpush1.msra.mxu0 0.0
    %221 = vmatprep.subr.mxu0 0.0
    %222 = vmatpush1.msra.mxu0 0.0
    %223 = vmatprep.subr.mxu0 0.0
    %224 = vmatpush1.msra.mxu0 0.0
    %225 = vmatprep.subr.mxu0 0.0
    %226 = vmatpush1.msra.mxu0 0.0
    %227 = vmatprep.subr.mxu0 0.0
    %228 = vmatpush1.msra.mxu0 0.0
    %229 = vmatprep.subr.mxu0 0.0
    %230 = vmatpush1.msra.mxu0 0.0
    %231 = vmatprep.subr.mxu0 0.0
    %232 = vmatpush1.msra.mxu0 0.0
    %233 = vmatprep.subr.mxu0 0.0
    %234 = vmatpush1.msra.mxu0 0.0
    %235 = vmatprep.subr.mxu0 0.0
    %236 = vmatpush1.msra.mxu0 0.0
    %237 = vmatprep.subr.mxu0 0.0
    %238 = vmatpush1.msra.mxu0 0.0
    %239 = vmatprep.subr.mxu0 0.0
    %240 = vmatpush1.msra.mxu0 0.0
    %241 = vmatprep.subr.mxu0 0.0
    %242 = vmatpush1.msra.mxu0 0.0
    %243 = vmatprep.subr.mxu0 0.0
    %244 = vmatpush1.msra.mxu0 0.0
    %245 = vmatprep.subr.mxu0 0.0
    %246 = vmatpush1.msra.mxu0 0.0
    %247 = vmatprep.subr.mxu0 0.0
    %248 = vmatpush1.msra.mxu0 0.0
    %249 = vmatprep.subr.mxu0 0.0
    %250 = vmatpush1.msra.mxu0 0.0
    %251 = vmatprep.subr.mxu0 0.0
    %252 = vmatpush1.msra.mxu0 0.0
    %253 = vmatprep.subr.mxu0 0.0
    %254 = vmatpush1.msra.mxu0 0.0
    %255 = vmatprep.subr.mxu0 0.0
    %256 = vmatpush1.msra.mxu0 0.0
    %257 = vmatprep.subr.mxu0 0.0
    %258 = vmatpush1.msra.mxu0 0.0
    %259 = vmatprep.subr.mxu0 0.0
    %260 = vmatpush1.msra.mxu0 0.0
    %261 = vmatprep.subr.mxu0 0.0
    %262 = vmatpush1.msra.mxu0 0.0
    %263 = vmatprep.subr.mxu0 0.0
    %264 = vmatpush1.msra.mxu0 0.0
    %265 = vmatprep.subr.mxu0 0.0
    %266 = vmatpush1.msra.mxu0 0.0
    %267 = vmatprep.subr.mxu0 0.0
    %268 = vmatpush1.msra.mxu0 0.0
    %269 = vmatprep.subr.mxu0 0.0
    %270 = vmatpush1.msra.mxu0 0.0
    %271 = vmatprep.mubr.f32.mxu0 0.0
    %272 = vmatmul.mubr.f32.gmra.mrb[0].mxu0 %v202
    %v273 = vpop.f32.mrb[0].mxu0
    %v274 = vadd.f32 %v199, %v273
    %v275 = vpop.f32.mrb[0].mxu0
    %276 = vdwg.mxu0
    %s277 = scalar_lea.vmem %s1, 48
    %v278 = vld [vmem:[%s277] sm:$0xff]
    %v279 = vld [vmem:[%s277 + $0x8] sm:$0x3]
    %s280 = scalar_lea.vmem %s2, 3
    %v281 = vld [vmem:[%s280] sm:$0x1]
    %v283 = vlaneseq
    %v284 = vshrl.u32 %v283, 7
    %v285 = vsub.s32 0, %v284
    %v286 = vrot.slane %v281, %v285
    %v289 = vsel %vm25, %v274, 0
    %v292 = vsel %vm29, %v279, 0
    %294 = vmatprep.subr.mxu0 0.0
    %295 = vmatpush1.msra.mxu0 %v278
    %296 = vmatprep.subr.mxu0 0.0
    %297 = vmatpush1.msra.mxu0 %v292
    %298 = vmatprep.subr.mxu0 0.0
    %299 = vmatpush1.msra.mxu0 0.0
    %300 = vmatprep.subr.mxu0 0.0
    %301 = vmatpush1.msra.mxu0 0.0
    %302 = vmatprep.subr.mxu0 0.0
    %303 = vmatpush1.msra.mxu0 0.0
    %304 = vmatprep.subr.mxu0 0.0
    %305 = vmatpush1.msra.mxu0 0.0
    %306 = vmatprep.subr.mxu0 0.0
    %307 = vmatpush1.msra.mxu0 0.0
    %308 = vmatprep.subr.mxu0 0.0
    %309 = vmatpush1.msra.mxu0 0.0
    %310 = vmatprep.subr.mxu0 0.0
    %311 = vmatpush1.msra.mxu0 0.0
    %312 = vmatprep.subr.mxu0 0.0
    %313 = vmatpush1.msra.mxu0 0.0
    %314 = vmatprep.subr.mxu0 0.0
    %315 = vmatpush1.msra.mxu0 0.0
    %316 = vmatprep.subr.mxu0 0.0
    %317 = vmatpush1.msra.mxu0 0.0
    %318 = vmatprep.subr.mxu0 0.0
    %319 = vmatpush1.msra.mxu0 0.0
    %320 = vmatprep.subr.mxu0 0.0
    %321 = vmatpush1.msra.mxu0 0.0
    %322 = vmatprep.subr.mxu0 0.0
    %323 = vmatpush1.msra.mxu0 0.0
    %324 = vmatprep.subr.mxu0 0.0
    %325 = vmatpush1.msra.mxu0 0.0
    %326 = vmatprep.subr.mxu0 0.0
    %327 = vmatpush1.msra.mxu0 0.0
    %328 = vmatprep.subr.mxu0 0.0
    %329 = vmatpush1.msra.mxu0 0.0
    %330 = vmatprep.subr.mxu0 0.0
    %331 = vmatpush1.msra.mxu0 0.0
    %332 = vmatprep.subr.mxu0 0.0
    %333 = vmatpush1.msra.mxu0 0.0
    %334 = vmatprep.subr.mxu0 0.0
    %335 = vmatpush1.msra.mxu0 0.0
    %336 = vmatprep.subr.mxu0 0.0
    %337 = vmatpush1.msra.mxu0 0.0
    %338 = vmatprep.subr.mxu0 0.0
    %339 = vmatpush1.msra.mxu0 0.0
    %340 = vmatprep.subr.mxu0 0.0
    %341 = vmatpush1.msra.mxu0 0.0
    %342 = vmatprep.subr.mxu0 0.0
    %343 = vmatpush1.msra.mxu0 0.0
    %344 = vmatprep.subr.mxu0 0.0
    %345 = vmatpush1.msra.mxu0 0.0
    %346 = vmatprep.subr.mxu0 0.0
    %347 = vmatpush1.msra.mxu0 0.0
    %348 = vmatprep.subr.mxu0 0.0
    %349 = vmatpush1.msra.mxu0 0.0
    %350 = vmatprep.subr.mxu0 0.0
    %351 = vmatpush1.msra.mxu0 0.0
    %352 = vmatprep.subr.mxu0 0.0
    %353 = vmatpush1.msra.mxu0 0.0
    %354 = vmatprep.subr.mxu0 0.0
    %355 = vmatpush1.msra.mxu0 0.0
    %356 = vmatprep.subr.mxu0 0.0
    %357 = vmatpush1.msra.mxu0 0.0
    %358 = vmatprep.mubr.f32.mxu0 0.0
    %359 = vmatmul.mubr.f32.gmra.mrb[0].mxu0 %v289
    %v360 = vpop.f32.mrb[0].mxu0
    %v361 = vadd.f32 %v286, %v360
    %v362 = vpop.f32.mrb[0].mxu0
    %363 = vdwg.mxu0
    %s364 = scalar_lea.vmem %s1, 64
    %v365 = vld [vmem:[%s364] sm:$0xff]
    %v366 = vld [vmem:[%s364 + $0x8] sm:$0x3]
    %s367 = scalar_lea.vmem %s2, 4
    %v368 = vld [vmem:[%s367] sm:$0x1]
    %v370 = vlaneseq
    %v371 = vshrl.u32 %v370, 7
    %v372 = vsub.s32 0, %v371
    %v373 = vrot.slane %v368, %v372
    %v376 = vsel %vm25, %v361, 0
    %v379 = vsel %vm29, %v366, 0
    %381 = vmatprep.subr.mxu0 0.0
    %382 = vmatpush1.msra.mxu0 %v365
    %383 = vmatprep.subr.mxu0 0.0
    %384 = vmatpush1.msra.mxu0 %v379
    %385 = vmatprep.subr.mxu0 0.0
    %386 = vmatpush1.msra.mxu0 0.0
    %387 = vmatprep.subr.mxu0 0.0
    %388 = vmatpush1.msra.mxu0 0.0
    %389 = vmatprep.subr.mxu0 0.0
    %390 = vmatpush1.msra.mxu0 0.0
    %391 = vmatprep.subr.mxu0 0.0
    %392 = vmatpush1.msra.mxu0 0.0
    %393 = vmatprep.subr.mxu0 0.0
    %394 = vmatpush1.msra.mxu0 0.0
    %395 = vmatprep.subr.mxu0 0.0
    %396 = vmatpush1.msra.mxu0 0.0
    %397 = vmatprep.subr.mxu0 0.0
    %398 = vmatpush1.msra.mxu0 0.0
    %399 = vmatprep.subr.mxu0 0.0
    %400 = vmatpush1.msra.mxu0 0.0
    %401 = vmatprep.subr.mxu0 0.0
    %402 = vmatpush1.msra.mxu0 0.0
    %403 = vmatprep.subr.mxu0 0.0
    %404 = vmatpush1.msra.mxu0 0.0
    %405 = vmatprep.subr.mxu0 0.0
    %406 = vmatpush1.msra.mxu0 0.0
    %407 = vmatprep.subr.mxu0 0.0
    %408 = vmatpush1.msra.mxu0 0.0
    %409 = vmatprep.subr.mxu0 0.0
    %410 = vmatpush1.msra.mxu0 0.0
    %411 = vmatprep.subr.mxu0 0.0
    %412 = vmatpush1.msra.mxu0 0.0
    %413 = vmatprep.subr.mxu0 0.0
    %414 = vmatpush1.msra.mxu0 0.0
    %415 = vmatprep.subr.mxu0 0.0
    %416 = vmatpush1.msra.mxu0 0.0
    %417 = vmatprep.subr.mxu0 0.0
    %418 = vmatpush1.msra.mxu0 0.0
    %419 = vmatprep.subr.mxu0 0.0
    %420 = vmatpush1.msra.mxu0 0.0
    %421 = vmatprep.subr.mxu0 0.0
    %422 = vmatpush1.msra.mxu0 0.0
    %423 = vmatprep.subr.mxu0 0.0
    %424 = vmatpush1.msra.mxu0 0.0
    %425 = vmatprep.subr.mxu0 0.0
    %426 = vmatpush1.msra.mxu0 0.0
    %427 = vmatprep.subr.mxu0 0.0
    %428 = vmatpush1.msra.mxu0 0.0
    %429 = vmatprep.subr.mxu0 0.0
    %430 = vmatpush1.msra.mxu0 0.0
    %431 = vmatprep.subr.mxu0 0.0
    %432 = vmatpush1.msra.mxu0 0.0
    %433 = vmatprep.subr.mxu0 0.0
    %434 = vmatpush1.msra.mxu0 0.0
    %435 = vmatprep.subr.mxu0 0.0
    %436 = vmatpush1.msra.mxu0 0.0
    %437 = vmatprep.subr.mxu0 0.0
    %438 = vmatpush1.msra.mxu0 0.0
    %439 = vmatprep.subr.mxu0 0.0
    %440 = vmatpush1.msra.mxu0 0.0
    %441 = vmatprep.subr.mxu0 0.0
    %442 = vmatpush1.msra.mxu0 0.0
    %443 = vmatprep.subr.mxu0 0.0
    %444 = vmatpush1.msra.mxu0 0.0
    %445 = vmatprep.mubr.f32.mxu0 0.0
    %446 = vmatmul.mubr.f32.gmra.mrb[0].mxu0 %v376
    %v447 = vpop.f32.mrb[0].mxu0
    %v448 = vadd.f32 %v373, %v447
    %v449 = vpop.f32.mrb[0].mxu0
    %450 = vdwg.mxu0
    %s451 = scalar_lea.vmem %s1, 80
    %v452 = vld [vmem:[%s451] sm:$0xff]
    %v453 = vld [vmem:[%s451 + $0x8] sm:$0x3]
    %s454 = scalar_lea.vmem %s2, 5
    %v455 = vld [vmem:[%s454] sm:$0x1]
    %v457 = vlaneseq
    %v458 = vshrl.u32 %v457, 7
    %v459 = vsub.s32 0, %v458
    %v460 = vrot.slane %v455, %v459
    %v463 = vsel %vm25, %v448, 0
    %v466 = vsel %vm29, %v453, 0
    %468 = vmatprep.subr.mxu0 0.0
    %469 = vmatpush1.msra.mxu0 %v452
    %470 = vmatprep.subr.mxu0 0.0
    %471 = vmatpush1.msra.mxu0 %v466
    %472 = vmatprep.subr.mxu0 0.0
    %473 = vmatpush1.msra.mxu0 0.0
    %474 = vmatprep.subr.mxu0 0.0
    %475 = vmatpush1.msra.mxu0 0.0
    %476 = vmatprep.subr.mxu0 0.0
    %477 = vmatpush1.msra.mxu0 0.0
    %478 = vmatprep.subr.mxu0 0.0
    %479 = vmatpush1.msra.mxu0 0.0
    %480 = vmatprep.subr.mxu0 0.0
    %481 = vmatpush1.msra.mxu0 0.0
    %482 = vmatprep.subr.mxu0 0.0
    %483 = vmatpush1.msra.mxu0 0.0
    %484 = vmatprep.subr.mxu0 0.0
    %485 = vmatpush1.msra.mxu0 0.0
    %486 = vmatprep.subr.mxu0 0.0
    %487 = vmatpush1.msra.mxu0 0.0
    %488 = vmatprep.subr.mxu0 0.0
    %489 = vmatpush1.msra.mxu0 0.0
    %490 = vmatprep.subr.mxu0 0.0
    %491 = vmatpush1.msra.mxu0 0.0
    %492 = vmatprep.subr.mxu0 0.0
    %493 = vmatpush1.msra.mxu0 0.0
    %494 = vmatprep.subr.mxu0 0.0
    %495 = vmatpush1.msra.mxu0 0.0
    %496 = vmatprep.subr.mxu0 0.0
    %497 = vmatpush1.msra.mxu0 0.0
    %498 = vmatprep.subr.mxu0 0.0
    %499 = vmatpush1.msra.mxu0 0.0
    %500 = vmatprep.subr.mxu0 0.0
    %501 = vmatpush1.msra.mxu0 0.0
    %502 = vmatprep.subr.mxu0 0.0
    %503 = vmatpush1.msra.mxu0 0.0
    %504 = vmatprep.subr.mxu0 0.0
    %505 = vmatpush1.msra.mxu0 0.0
    %506 = vmatprep.subr.mxu0 0.0
    %507 = vmatpush1.msra.mxu0 0.0
    %508 = vmatprep.subr.mxu0 0.0
    %509 = vmatpush1.msra.mxu0 0.0
    %510 = vmatprep.subr.mxu0 0.0
    %511 = vmatpush1.msra.mxu0 0.0
    %512 = vmatprep.subr.mxu0 0.0
    %513 = vmatpush1.msra.mxu0 0.0
    %514 = vmatprep.subr.mxu0 0.0
    %515 = vmatpush1.msra.mxu0 0.0
    %516 = vmatprep.subr.mxu0 0.0
    %517 = vmatpush1.msra.mxu0 0.0
    %518 = vmatprep.subr.mxu0 0.0
    %519 = vmatpush1.msra.mxu0 0.0
    %520 = vmatprep.subr.mxu0 0.0
    %521 = vmatpush1.msra.mxu0 0.0
    %522 = vmatprep.subr.mxu0 0.0
    %523 = vmatpush1.msra.mxu0 0.0
    %524 = vmatprep.subr.mxu0 0.0
    %525 = vmatpush1.msra.mxu0 0.0
    %526 = vmatprep.subr.mxu0 0.0
    %527 = vmatpush1.msra.mxu0 0.0
    %528 = vmatprep.subr.mxu0 0.0
    %529 = vmatpush1.msra.mxu0 0.0
    %530 = vmatprep.subr.mxu0 0.0
    %531 = vmatpush1.msra.mxu0 0.0
    %532 = vmatprep.mubr.f32.mxu0 0.0
    %533 = vmatmul.mubr.f32.gmra.mrb[0].mxu0 %v463
    %v534 = vpop.f32.mrb[0].mxu0
    %v535 = vadd.f32 %v460, %v534
    %v536 = vpop.f32.mrb[0].mxu0
    %537 = vdwg.mxu0
    %s538 = scalar_lea.vmem %s1, 96
    %v539 = vld [vmem:[%s538] sm:$0xff]
    %v540 = vld [vmem:[%s538 + $0x8] sm:$0x3]
    %s541 = scalar_lea.vmem %s2, 6
    %v542 = vld [vmem:[%s541] sm:$0x1]
    %v544 = vlaneseq
    %v545 = vshrl.u32 %v544, 7
    %v546 = vsub.s32 0, %v545
    %v547 = vrot.slane %v542, %v546
    %v550 = vsel %vm25, %v535, 0
    %v553 = vsel %vm29, %v540, 0
    %555 = vmatprep.subr.mxu0 0.0
    %556 = vmatpush1.msra.mxu0 %v539
    %557 = vmatprep.subr.mxu0 0.0
    %558 = vmatpush1.msra.mxu0 %v553
    %559 = vmatprep.subr.mxu0 0.0
    %560 = vmatpush1.msra.mxu0 0.0
    %561 = vmatprep.subr.mxu0 0.0
    %562 = vmatpush1.msra.mxu0 0.0
    %563 = vmatprep.subr.mxu0 0.0
    %564 = vmatpush1.msra.mxu0 0.0
    %565 = vmatprep.subr.mxu0 0.0
    %566 = vmatpush1.msra.mxu0 0.0
    %567 = vmatprep.subr.mxu0 0.0
    %568 = vmatpush1.msra.mxu0 0.0
    %569 = vmatprep.subr.mxu0 0.0
    %570 = vmatpush1.msra.mxu0 0.0
    %571 = vmatprep.subr.mxu0 0.0
    %572 = vmatpush1.msra.mxu0 0.0
    %573 = vmatprep.subr.mxu0 0.0
    %574 = vmatpush1.msra.mxu0 0.0
    %575 = vmatprep.subr.mxu0 0.0
    %576 = vmatpush1.msra.mxu0 0.0
    %577 = vmatprep.subr.mxu0 0.0
    %578 = vmatpush1.msra.mxu0 0.0
    %579 = vmatprep.subr.mxu0 0.0
    %580 = vmatpush1.msra.mxu0 0.0
    %581 = vmatprep.subr.mxu0 0.0
    %582 = vmatpush1.msra.mxu0 0.0
    %583 = vmatprep.subr.mxu0 0.0
    %584 = vmatpush1.msra.mxu0 0.0
    %585 = vmatprep.subr.mxu0 0.0
    %586 = vmatpush1.msra.mxu0 0.0
    %587 = vmatprep.subr.mxu0 0.0
    %588 = vmatpush1.msra.mxu0 0.0
    %589 = vmatprep.subr.mxu0 0.0
    %590 = vmatpush1.msra.mxu0 0.0
    %591 = vmatprep.subr.mxu0 0.0
    %592 = vmatpush1.msra.mxu0 0.0
    %593 = vmatprep.subr.mxu0 0.0
    %594 = vmatpush1.msra.mxu0 0.0
    %595 = vmatprep.subr.mxu0 0.0
    %596 = vmatpush1.msra.mxu0 0.0
    %597 = vmatprep.subr.mxu0 0.0
    %598 = vmatpush1.msra.mxu0 0.0
    %599 = vmatprep.subr.mxu0 0.0
    %600 = vmatpush1.msra.mxu0 0.0
    %601 = vmatprep.subr.mxu0 0.0
    %602 = vmatpush1.msra.mxu0 0.0
    %603 = vmatprep.subr.mxu0 0.0
    %604 = vmatpush1.msra.mxu0 0.0
    %605 = vmatprep.subr.mxu0 0.0
    %606 = vmatpush1.msra.mxu0 0.0
    %607 = vmatprep.subr.mxu0 0.0
    %608 = vmatpush1.msra.mxu0 0.0
    %609 = vmatprep.subr.mxu0 0.0
    %610 = vmatpush1.msra.mxu0 0.0
    %611 = vmatprep.subr.mxu0 0.0
    %612 = vmatpush1.msra.mxu0 0.0
    %613 = vmatprep.subr.mxu0 0.0
    %614 = vmatpush1.msra.mxu0 0.0
    %615 = vmatprep.subr.mxu0 0.0
    %616 = vmatpush1.msra.mxu0 0.0
    %617 = vmatprep.subr.mxu0 0.0
    %618 = vmatpush1.msra.mxu0 0.0
    %619 = vmatprep.mubr.f32.mxu0 0.0
    %620 = vmatmul.mubr.f32.gmra.mrb[0].mxu0 %v550
    %v621 = vpop.f32.mrb[0].mxu0
    %v622 = vadd.f32 %v547, %v621
    %v623 = vpop.f32.mrb[0].mxu0
    %624 = vdwg.mxu0
    %s625 = scalar_lea.vmem %s1, 112
    %v626 = vld [vmem:[%s625] sm:$0xff]
    %v627 = vld [vmem:[%s625 + $0x8] sm:$0x3]
    %s628 = scalar_lea.vmem %s2, 7
    %v629 = vld [vmem:[%s628] sm:$0x1]
    %v631 = vlaneseq
    %v632 = vshrl.u32 %v631, 7
    %v633 = vsub.s32 0, %v632
    %v634 = vrot.slane %v629, %v633
    %v637 = vsel %vm25, %v622, 0
    %v640 = vsel %vm29, %v627, 0
    %642 = vmatprep.subr.mxu0 0.0
    %643 = vmatpush1.msra.mxu0 %v626
    %644 = vmatprep.subr.mxu0 0.0
    %645 = vmatpush1.msra.mxu0 %v640
    %646 = vmatprep.subr.mxu0 0.0
    %647 = vmatpush1.msra.mxu0 0.0
    %648 = vmatprep.subr.mxu0 0.0
    %649 = vmatpush1.msra.mxu0 0.0
    %650 = vmatprep.subr.mxu0 0.0
    %651 = vmatpush1.msra.mxu0 0.0
    %652 = vmatprep.subr.mxu0 0.0
    %653 = vmatpush1.msra.mxu0 0.0
    %654 = vmatprep.subr.mxu0 0.0
    %655 = vmatpush1.msra.mxu0 0.0
    %656 = vmatprep.subr.mxu0 0.0
    %657 = vmatpush1.msra.mxu0 0.0
    %658 = vmatprep.subr.mxu0 0.0
    %659 = vmatpush1.msra.mxu0 0.0
    %660 = vmatprep.subr.mxu0 0.0
    %661 = vmatpush1.msra.mxu0 0.0
    %662 = vmatprep.subr.mxu0 0.0
    %663 = vmatpush1.msra.mxu0 0.0
    %664 = vmatprep.subr.mxu0 0.0
    %665 = vmatpush1.msra.mxu0 0.0
    %666 = vmatprep.subr.mxu0 0.0
    %667 = vmatpush1.msra.mxu0 0.0
    %668 = vmatprep.subr.mxu0 0.0
    %669 = vmatpush1.msra.mxu0 0.0
    %670 = vmatprep.subr.mxu0 0.0
    %671 = vmatpush1.msra.mxu0 0.0
    %672 = vmatprep.subr.mxu0 0.0
    %673 = vmatpush1.msra.mxu0 0.0
    %674 = vmatprep.subr.mxu0 0.0
    %675 = vmatpush1.msra.mxu0 0.0
    %676 = vmatprep.subr.mxu0 0.0
    %677 = vmatpush1.msra.mxu0 0.0
    %678 = vmatprep.subr.mxu0 0.0
    %679 = vmatpush1.msra.mxu0 0.0
    %680 = vmatprep.subr.mxu0 0.0
    %681 = vmatpush1.msra.mxu0 0.0
    %682 = vmatprep.subr.mxu0 0.0
    %683 = vmatpush1.msra.mxu0 0.0
    %684 = vmatprep.subr.mxu0 0.0
    %685 = vmatpush1.msra.mxu0 0.0
    %686 = vmatprep.subr.mxu0 0.0
    %687 = vmatpush1.msra.mxu0 0.0
    %688 = vmatprep.subr.mxu0 0.0
    %689 = vmatpush1.msra.mxu0 0.0
    %690 = vmatprep.subr.mxu0 0.0
    %691 = vmatpush1.msra.mxu0 0.0
    %692 = vmatprep.subr.mxu0 0.0
    %693 = vmatpush1.msra.mxu0 0.0
    %694 = vmatprep.subr.mxu0 0.0
    %695 = vmatpush1.msra.mxu0 0.0
    %696 = vmatprep.subr.mxu0 0.0
    %697 = vmatpush1.msra.mxu0 0.0
    %698 = vmatprep.subr.mxu0 0.0
    %699 = vmatpush1.msra.mxu0 0.0
    %700 = vmatprep.subr.mxu0 0.0
    %701 = vmatpush1.msra.mxu0 0.0
    %702 = vmatprep.subr.mxu0 0.0
    %703 = vmatpush1.msra.mxu0 0.0
    %704 = vmatprep.subr.mxu0 0.0
    %705 = vmatpush1.msra.mxu0 0.0
    %706 = vmatprep.mubr.f32.mxu0 0.0
    %707 = vmatmul.mubr.f32.gmra.mrb[0].mxu0 %v637
    %v708 = vpop.f32.mrb[0].mxu0
    %v709 = vadd.f32 %v634, %v708
    %v710 = vpop.f32.mrb[0].mxu0
    %711 = vdwg.mxu0
    %s712 = scalar_lea.vmem %s1, 128
    %v713 = vld [vmem:[%s712] sm:$0xff]
    %v714 = vld [vmem:[%s712 + $0x8] sm:$0x3]
    %s715 = scalar_lea.vmem %s2, 8
    %v716 = vld [vmem:[%s715] sm:$0x1]
    %v718 = vlaneseq
    %v719 = vshrl.u32 %v718, 7
    %v720 = vsub.s32 0, %v719
    %v721 = vrot.slane %v716, %v720
    %v724 = vsel %vm25, %v709, 0
    %v727 = vsel %vm29, %v714, 0
    %729 = vmatprep.subr.mxu0 0.0
    %730 = vmatpush1.msra.mxu0 %v713
    %731 = vmatprep.subr.mxu0 0.0
    %732 = vmatpush1.msra.mxu0 %v727
    %733 = vmatprep.subr.mxu0 0.0
    %734 = vmatpush1.msra.mxu0 0.0
    %735 = vmatprep.subr.mxu0 0.0
    %736 = vmatpush1.msra.mxu0 0.0
    %737 = vmatprep.subr.mxu0 0.0
    %738 = vmatpush1.msra.mxu0 0.0
    %739 = vmatprep.subr.mxu0 0.0
    %740 = vmatpush1.msra.mxu0 0.0
    %741 = vmatprep.subr.mxu0 0.0
    %742 = vmatpush1.msra.mxu0 0.0
    %743 = vmatprep.subr.mxu0 0.0
    %744 = vmatpush1.msra.mxu0 0.0
    %745 = vmatprep.subr.mxu0 0.0
    %746 = vmatpush1.msra.mxu0 0.0
    %747 = vmatprep.subr.mxu0 0.0
    %748 = vmatpush1.msra.mxu0 0.0
    %749 = vmatprep.subr.mxu0 0.0
    %750 = vmatpush1.msra.mxu0 0.0
    %751 = vmatprep.subr.mxu0 0.0
    %752 = vmatpush1.msra.mxu0 0.0
    %753 = vmatprep.subr.mxu0 0.0
    %754 = vmatpush1.msra.mxu0 0.0
    %755 = vmatprep.subr.mxu0 0.0
    %756 = vmatpush1.msra.mxu0 0.0
    %757 = vmatprep.subr.mxu0 0.0
    %758 = vmatpush1.msra.mxu0 0.0
    %759 = vmatprep.subr.mxu0 0.0
    %760 = vmatpush1.msra.mxu0 0.0
    %761 = vmatprep.subr.mxu0 0.0
    %762 = vmatpush1.msra.mxu0 0.0
    %763 = vmatprep.subr.mxu0 0.0
    %764 = vmatpush1.msra.mxu0 0.0
    %765 = vmatprep.subr.mxu0 0.0
    %766 = vmatpush1.msra.mxu0 0.0
    %767 = vmatprep.subr.mxu0 0.0
    %768 = vmatpush1.msra.mxu0 0.0
    %769 = vmatprep.subr.mxu0 0.0
    %770 = vmatpush1.msra.mxu0 0.0
    %771 = vmatprep.subr.mxu0 0.0
    %772 = vmatpush1.msra.mxu0 0.0
    %773 = vmatprep.subr.mxu0 0.0
    %774 = vmatpush1.msra.mxu0 0.0
    %775 = vmatprep.subr.mxu0 0.0
    %776 = vmatpush1.msra.mxu0 0.0
    %777 = vmatprep.subr.mxu0 0.0
    %778 = vmatpush1.msra.mxu0 0.0
    %779 = vmatprep.subr.mxu0 0.0
    %780 = vmatpush1.msra.mxu0 0.0
    %781 = vmatprep.subr.mxu0 0.0
    %782 = vmatpush1.msra.mxu0 0.0
    %783 = vmatprep.subr.mxu0 0.0
    %784 = vmatpush1.msra.mxu0 0.0
    %785 = vmatprep.subr.mxu0 0.0
    %786 = vmatpush1.msra.mxu0 0.0
    %787 = vmatprep.subr.mxu0 0.0
    %788 = vmatpush1.msra.mxu0 0.0
    %789 = vmatprep.subr.mxu0 0.0
    %790 = vmatpush1.msra.mxu0 0.0
    %791 = vmatprep.subr.mxu0 0.0
    %792 = vmatpush1.msra.mxu0 0.0
    %793 = vmatprep.mubr.f32.mxu0 0.0
    %794 = vmatmul.mubr.f32.gmra.mrb[0].mxu0 %v724
    %v795 = vpop.f32.mrb[0].mxu0
    %v796 = vadd.f32 %v721, %v795
    %v797 = vpop.f32.mrb[0].mxu0
    %798 = vdwg.mxu0
    %s799 = scalar_lea.vmem %s1, 144
    %v800 = vld [vmem:[%s799] sm:$0xff]
    %v801 = vld [vmem:[%s799 + $0x8] sm:$0x3]
    %s802 = scalar_lea.vmem %s2, 9
    %v803 = vld [vmem:[%s802] sm:$0x1]
    %v805 = vlaneseq
    %v806 = vshrl.u32 %v805, 7
    %v807 = vsub.s32 0, %v806
    %v808 = vrot.slane %v803, %v807
    %v811 = vsel %vm25, %v796, 0
    %v814 = vsel %vm29, %v801, 0
    %816 = vmatprep.subr.mxu0 0.0
    %817 = vmatpush1.msra.mxu0 %v800
    %818 = vmatprep.subr.mxu0 0.0
    %819 = vmatpush1.msra.mxu0 %v814
    %820 = vmatprep.subr.mxu0 0.0
    %821 = vmatpush1.msra.mxu0 0.0
    %822 = vmatprep.subr.mxu0 0.0
    %823 = vmatpush1.msra.mxu0 0.0
    %824 = vmatprep.subr.mxu0 0.0
    %825 = vmatpush1.msra.mxu0 0.0
    %826 = vmatprep.subr.mxu0 0.0
    %827 = vmatpush1.msra.mxu0 0.0
    %828 = vmatprep.subr.mxu0 0.0
    %829 = vmatpush1.msra.mxu0 0.0
    %830 = vmatprep.subr.mxu0 0.0
    %831 = vmatpush1.msra.mxu0 0.0
    %832 = vmatprep.subr.mxu0 0.0
    %833 = vmatpush1.msra.mxu0 0.0
    %834 = vmatprep.subr.mxu0 0.0
    %835 = vmatpush1.msra.mxu0 0.0
    %836 = vmatprep.subr.mxu0 0.0
    %837 = vmatpush1.msra.mxu0 0.0
    %838 = vmatprep.subr.mxu0 0.0
    %839 = vmatpush1.msra.mxu0 0.0
    %840 = vmatprep.subr.mxu0 0.0
    %841 = vmatpush1.msra.mxu0 0.0
    %842 = vmatprep.subr.mxu0 0.0
    %843 = vmatpush1.msra.mxu0 0.0
    %844 = vmatprep.subr.mxu0 0.0
    %845 = vmatpush1.msra.mxu0 0.0
    %846 = vmatprep.subr.mxu0 0.0
    %847 = vmatpush1.msra.mxu0 0.0
    %848 = vmatprep.subr.mxu0 0.0
    %849 = vmatpush1.msra.mxu0 0.0
    %850 = vmatprep.subr.mxu0 0.0
    %851 = vmatpush1.msra.mxu0 0.0
    %852 = vmatprep.subr.mxu0 0.0
    %853 = vmatpush1.msra.mxu0 0.0
    %854 = vmatprep.subr.mxu0 0.0
    %855 = vmatpush1.msra.mxu0 0.0
    %856 = vmatprep.subr.mxu0 0.0
    %857 = vmatpush1.msra.mxu0 0.0
    %858 = vmatprep.subr.mxu0 0.0
    %859 = vmatpush1.msra.mxu0 0.0
    %860 = vmatprep.subr.mxu0 0.0
    %861 = vmatpush1.msra.mxu0 0.0
    %862 = vmatprep.subr.mxu0 0.0
    %863 = vmatpush1.msra.mxu0 0.0
    %864 = vmatprep.subr.mxu0 0.0
    %865 = vmatpush1.msra.mxu0 0.0
    %866 = vmatprep.subr.mxu0 0.0
    %867 = vmatpush1.msra.mxu0 0.0
    %868 = vmatprep.subr.mxu0 0.0
    %869 = vmatpush1.msra.mxu0 0.0
    %870 = vmatprep.subr.mxu0 0.0
    %871 = vmatpush1.msra.mxu0 0.0
    %872 = vmatprep.subr.mxu0 0.0
    %873 = vmatpush1.msra.mxu0 0.0
    %874 = vmatprep.subr.mxu0 0.0
    %875 = vmatpush1.msra.mxu0 0.0
    %876 = vmatprep.subr.mxu0 0.0
    %877 = vmatpush1.msra.mxu0 0.0
    %878 = vmatprep.subr.mxu0 0.0
    %879 = vmatpush1.msra.mxu0 0.0
    %880 = vmatprep.mubr.f32.mxu0 0.0
    %881 = vmatmul.mubr.f32.gmra.mrb[0].mxu0 %v811
    %v882 = vpop.f32.mrb[0].mxu0
    %v883 = vadd.f32 %v808, %v882
    %v884 = vpop.f32.mrb[0].mxu0
    %885 = vdwg.mxu0
    %886 = vst.msk [vmem:[#allocation2] sm:$0xff] %vm25, %v883
    // Predicated region
    $region14: #{my_module_list_forward.1} parent=1 // pred_check
      _
    $region15: #{my_module_list_forward.1} parent=1 // pred_check_branch
      %888 = sbr.rel (0) target = $region17
    $region16: #{my_module_list_forward.1} parent=1 // pred_region
      %s890 = ssub.s32 128, 128
      %891 = vsyncadd [#allocation3], %s890
      %s893 = sshll.u32 [#allocation2], 4
      %s894 = int_to_ptr.vmem [resolvable:$true] %s893
      %896 = dma.vmem_to_hbm [thread:$0]  %s894, 128, %s3, [#allocation3]
    $region17: #{my_module_list_forward.1} parent=1 // pred_fallthru
      _
    // Predicated region
    $region18: #{my_module_list_forward.1} parent=1 // pred_check
      _
    $region19: #{my_module_list_forward.1} parent=1 // pred_check_branch
      %898 = sbr.rel (0) target = $region21
    $region20: #{my_module_list_forward.1} parent=1 // pred_region
      %899 = dma.done [#allocation3], 128
    $region21: #{my_module_list_forward.1} parent=1 // pred_fallthru
      _
    %900 = vsyncpa [#allocation3], 1

</llo_original>
